<compile_context>
chip_gen: v7x
topology: tpu7x:2x2x1
jax: 0.10.0
libtpu: 0.0.40
codegen_flags: <defaults>
</compile_context>

<pallas_src>
import math

import jax
import jax.numpy as jnp
from jax.experimental import pallas as pl
from jax.experimental.pallas import tpu as pltpu


def _round_up(x, m):
    return ((x + m - 1) // m) * m


def _rotation_kernel(x_ref, w_ref, b_ref, g_ref, o_ref):
    # x_ref: (tm, Cf)   w_ref: (Cf, Of)   b_ref: (1, Of) f32   g_ref: (Of, Of) f32
    # o_ref: (tm, Of)   with Cf = G*C, Of = 4*G.
    quats = jnp.dot(x_ref[...], w_ref[...], preferred_element_type=jnp.float32)
    quats = quats + b_ref[...]
    # Per-quaternion (4-lane group) sum of squares via a block-diagonal ones
    # matrix: each lane gathers its own group's sum, no relayout needed.
    sumsq = jnp.dot(quats * quats, g_ref[...], preferred_element_type=jnp.float32)
    o_ref[...] = (quats * jax.lax.rsqrt(sumsq)).astype(o_ref.dtype)


def fold_rotation_params(weight, bias, x_dtype=jnp.float32):
    """Build the folded (block-diagonal) operands once per weight set."""
    C = weight.shape[1]
    itemsize = jnp.dtype(x_dtype).itemsize
    # G = 32 makes the output fully lane-dense (Of = 4*G = 128).  Fall back to
    # G = 1 only if the folded weight would be unreasonably large (huge C).
    G = 32 if (32 * C * 128 * itemsize) <= (8 << 20) else 1
    Cf, Of = G * C, 4 * G

    w_t = weight.T.astype(x_dtype)                                  # (C, 4)
    eye_g = jnp.eye(G, dtype=x_dtype)
    w_fold = jnp.einsum("gh,co->gcho", eye_g, w_t).reshape(Cf, Of)  # block-diag
    b_fold = jnp.tile(bias.astype(jnp.float32), G).reshape(1, Of)
    g_mat = jnp.kron(jnp.eye(G, dtype=jnp.float32),
                     jnp.ones((4, 4), dtype=jnp.float32))           # (Of, Of)
    return dict(G=G, Cf=Cf, Of=Of, w_fold=w_fold, b_fold=b_fold, g_mat=g_mat)


def rotation_predictor(x, weight, bias, folded=None):
    """x: (..., C). weight: (4, C), bias: (4,). Returns (..., 4)."""
    orig_shape = x.shape
    C = orig_shape[-1]
    out_dtype = x.dtype
    itemsize = jnp.dtype(out_dtype).itemsize

    if folded is None:
        folded = fold_rotation_params(weight, bias, out_dtype)
    G, Cf, Of = folded["G"], folded["Cf"], folded["Of"]
    w_fold, b_fold, g_mat = folded["w_fold"], folded["b_fold"], folded["g_mat"]

    x2d = x.reshape(-1, C)
    M = x2d.shape[0]

    # Pad only to a multiple of G (<= G-1 rows) so the lane fold is a pure
    # reshape; the ragged final row-tile is handled by Pallas block masking.
    Mg = _round_up(M, G)
    if Mg != M:
        x2d = jnp.pad(x2d, ((0, Mg - M), (0, 0)))
    Mf = Mg // G
    x_fold = x2d.reshape(Mf, Cf)

    # ---- Tile selection: ~8 MiB of x per grid step, tm multiple of 32 ------
    target_bytes = 8 << 20
    tm = max(32, (target_bytes // (Cf * itemsize)) // 32 * 32)
    if tm >= Mf:
        tm = Mf                                   # single step: block == array
        ngrid = 1
    else:
        ngrid = pl.cdiv(Mf, tm)
        tm = _round_up(pl.cdiv(Mf, ngrid), 32)    # rebalance, keep 32-multiple
        ngrid = pl.cdiv(Mf, tm)                   # ragged tail handled by Pallas

    # ---- VMEM limit from the actual footprint (v7x: 64 MiB physical) -------
    vmem_bytes = (2 * tm * (Cf + Of) * itemsize                 # dbl-buf tiles
                  + 2 * (Cf * Of * itemsize + Of * Of * 4 + Of * 4)  # weights
                  + (4 << 20))                                  # scratch slack
    vmem_limit = max(int(vmem_bytes), 8 << 20)

    cost = pl.CostEstimate(
        flops=2 * Mf * Cf * Of + 2 * Mf * Of * Of + 4 * Mf * Of,
        transcendentals=Mf * Of,
        bytes_accessed=(Mf * Cf + Mf * Of + Cf * Of) * itemsize
                       + Of * Of * 4 + Of * 4,
    )

    def _run(dim_sem):
        return pl.pallas_call(
            _rotation_kernel,
            out_shape=jax.ShapeDtypeStruct((Mf, Of), out_dtype),
            grid_spec=pltpu.PrefetchScalarGridSpec(
                num_scalar_prefetch=0,
                grid=(ngrid,),
                in_specs=[
                    pl.BlockSpec((tm, Cf), lambda i: (i, 0)),   # streamed x
                    pl.BlockSpec((Cf, Of), lambda i: (0, 0)),   # resident W
                    pl.BlockSpec((1, Of), lambda i: (0, 0)),    # resident bias
                    pl.BlockSpec((Of, Of), lambda i: (0, 0)),   # resident group
                ],
                out_specs=pl.BlockSpec((tm, Of), lambda i: (i, 0)),
            ),
            compiler_params=pltpu.CompilerParams(
                dimension_semantics=(dim_sem,),
                vmem_limit_bytes=vmem_limit,
            ),
            cost_estimate=cost,
        )(x_fold, w_fold, b_fold, g_mat)

    # v7x only: shard the row grid across both TensorCores when there is work
    # to split; fall back to "parallel" if CORE_PARALLEL is rejected.
    candidates = ["parallel"]
    if ngrid >= 2:
        try:
            kind = jax.devices()[0].device_kind.lower()
        except Exception:
            kind = ""
        core_par = getattr(pltpu, "CORE_PARALLEL", None)
        if core_par is not None and ("v7" in kind or "7x" in kind):
            candidates.insert(0, core_par)

    out = None
    err = None
    for sem in candidates:
        try:
            out = _run(sem)
            break
        except Exception as e:          # pragma: no cover - fallback path
            err = e
    if out is None:
        raise err

    # Padded lanes/rows (which may be non-finite if bias ~ 0) are sliced away.
    out = out.reshape(Mf * G, 4)[:M]
    return out.reshape(*orig_shape[:-1], 4)


def _reference(x, weight, bias):
    quats = jnp.einsum("...c,oc->...o", x, weight) + bias
    norm = jnp.sqrt(jnp.sum(quats * quats, axis=-1, keepdims=True))
    return quats / norm


if __name__ == "__main__":
    key = jax.random.PRNGKey(0)
    k_x, k_w, k_b = jax.random.split(key, 3)

    # Small shapes: batch=2, seq=8, in_channels=32
    B, S, C = 2, 8, 32
    x = jax.random.normal(k_x, (B, S, C), dtype=jnp.float32)

    # Deterministic parameter init mimicking nn.Linear defaults:
    # U(-1/sqrt(C), 1/sqrt(C))
    bound = 1.0 / math.sqrt(C)
    weight = jax.random.uniform(k_w, (4, C), minval=-bound, maxval=bound,
                                dtype=jnp.float32)
    bias = jax.random.uniform(k_b, (4,), minval=-bound, maxval=bound,
                              dtype=jnp.float32)

    # Fold weights once (hoisted out of the per-call path), then apply.
    folded = fold_rotation_params(weight, bias, x.dtype)
    out = rotation_predictor(x, weight, bias, folded=folded)
    out = jax.block_until_ready(out)

    ref = _reference(x, weight, bias)
    assert out.shape == (B, S, 4)
    assert jnp.allclose(out, ref, atol=1e-5, rtol=1e-5), "mismatch vs reference"

    print("KERNEL_OK")
</pallas_src>

<mosaic_0001>
module attributes {stable_mosaic.version = 11 : i64} {
  func.func @_rotation_kernel(%arg0: i32, %arg1: memref<1x1024xf32, #tpu.memory_space<vmem>>, %arg2: memref<1024x128xf32, #tpu.memory_space<vmem>>, %arg3: memref<1x128xf32, #tpu.memory_space<vmem>>, %arg4: memref<128x128xf32, #tpu.memory_space<vmem>>, %arg5: memref<1x128xf32, #tpu.memory_space<vmem>>) attributes {dimension_semantics = [#tpu.dimension_semantics<parallel>], iteration_bounds = array<i64: 1>, scalar_prefetch = 0 : i64, scratch_operands = 0 : i64, tpu.core_type = #tpu.core_type<tc>, window_params = [{transform_indices = @transform_0, window_bounds = array<i64: 1, 1024>}, {pipeline_mode = #tpu.pipeline_mode<synchronous>, transform_indices = @transform_1, window_bounds = array<i64: 1024, 128>}, {pipeline_mode = #tpu.pipeline_mode<synchronous>, transform_indices = @transform_2, window_bounds = array<i64: 1, 128>}, {pipeline_mode = #tpu.pipeline_mode<synchronous>, transform_indices = @transform_3, window_bounds = array<i64: 128, 128>}, {transform_indices = @transform_4, window_bounds = array<i64: 1, 128>}]} {
    %c0 = arith.constant 0 : index
    %c0_0 = arith.constant 0 : index
    %0 = vector.load %arg1[%c0, %c0_0] : memref<1x1024xf32, #tpu.memory_space<vmem>>, vector<1x1024xf32>
    %c0_1 = arith.constant 0 : index
    %c0_2 = arith.constant 0 : index
    %1 = vector.load %arg2[%c0_1, %c0_2] : memref<1024x128xf32, #tpu.memory_space<vmem>>, vector<1024x128xf32>
    %cst = arith.constant dense<0.000000e+00> : vector<1x128xf32>
    %2 = tpu.matmul %0, %1, %cst {dimension_numbers = #tpu.dot_dimension_numbers<[1], [0], [0], [1], [0, 0, 1, 1], [], []>} : vector<1x1024xf32>, vector<1024x128xf32>, vector<1x128xf32> -> vector<1x128xf32>
    %c0_3 = arith.constant 0 : index
    %c0_4 = arith.constant 0 : index
    %3 = vector.load %arg3[%c0_3, %c0_4] : memref<1x128xf32, #tpu.memory_space<vmem>>, vector<1x128xf32>
    %4 = arith.addf %2, %3 : vector<1x128xf32>
    %5 = arith.mulf %4, %4 : vector<1x128xf32>
    %c0_5 = arith.constant 0 : index
    %c0_6 = arith.constant 0 : index
    %6 = vector.load %arg4[%c0_5, %c0_6] : memref<128x128xf32, #tpu.memory_space<vmem>>, vector<128x128xf32>
    %cst_7 = arith.constant dense<0.000000e+00> : vector<1x128xf32>
    %7 = tpu.matmul %5, %6, %cst_7 {dimension_numbers = #tpu.dot_dimension_numbers<[1], [0], [0], [1], [0, 0, 1, 1], [], []>} : vector<1x128xf32>, vector<128x128xf32>, vector<1x128xf32> -> vector<1x128xf32>
    %8 = math.rsqrt %7 : vector<1x128xf32>
    %9 = arith.mulf %4, %8 : vector<1x128xf32>
    %c0_8 = arith.constant 0 : index
    %c0_9 = arith.constant 0 : index
    %10 = vector.load %arg5[%c0_8, %c0_9] : memref<1x128xf32, #tpu.memory_space<vmem>>, vector<1x128xf32>
    tpu.vector_store %arg5[%c0_8, %c0_9], %9 {strides = array<i32>} : memref<1x128xf32, #tpu.memory_space<vmem>>, vector<1x128xf32>,
    return
  }
  func.func @transform_0(%arg0: i32) -> (i32, i32) {
    %c0_i32 = arith.constant 0 : i32
    %c0_i32_0 = arith.constant 0 : i32
    return %arg0, %c0_i32 : i32, i32
  }
  func.func @transform_1(%arg0: i32) -> (i32, i32) {
    %c0_i32 = arith.constant 0 : i32
    %c0_i32_0 = arith.constant 0 : i32
    %c0_i32_1 = arith.constant 0 : i32
    return %c0_i32, %c0_i32_0 : i32, i32
  }
  func.func @transform_2(%arg0: i32) -> (i32, i32) {
    %c0_i32 = arith.constant 0 : i32
    %c0_i32_0 = arith.constant 0 : i32
    %c0_i32_1 = arith.constant 0 : i32
    return %c0_i32, %c0_i32_0 : i32, i32
  }
  func.func @transform_3(%arg0: i32) -> (i32, i32) {
    %c0_i32 = arith.constant 0 : i32
    %c0_i32_0 = arith.constant 0 : i32
    %c0_i32_1 = arith.constant 0 : i32
    return %c0_i32, %c0_i32_0 : i32, i32
  }
  func.func @transform_4(%arg0: i32) -> (i32, i32) {
    %c0_i32 = arith.constant 0 : i32
    %c0_i32_0 = arith.constant 0 : i32
    return %arg0, %c0_i32 : i32, i32
  }
}

</mosaic_0001>

<llo_original>
// kernel: tpu_custom_call.1
$region0: #{tpu_custom_call.1}
  #allocation0 [shape = 'u32[]', space=smem, size = 0x4, offset = 0x4, fixed_abs, tag = 'smem constant byte address 0x4 - core index']
  #allocation1 [shape = 'u32[144,128]{1,0:T(1,128)}', space=vmem, size = 0x12000, scoped, tag = 'internal scratch']
  %s0 = inlined_call_operand.hbm [shape: f32[1,1024], index: 0, kind: input, shape index: {}]
  %s1 = inlined_call_operand.hbm [shape: f32[1024,128], index: 1, kind: input, shape index: {}]
  %s2 = inlined_call_operand.vmem [shape: f32[1,128], index: 2, kind: input, shape index: {}]
  %s3 = inlined_call_operand.hbm [shape: f32[128,128], index: 3, kind: input, shape index: {}]
  %s4 = inlined_call_operand.hbm [shape: f32[1,128], index: 4, kind: output, shape index: {}]
  %s5 = sld [smem:[#allocation0]]
  $region38: #{tpu_custom_call.1} parent=0
    _
  %s7 = ssub.s32 1, %s5
  %s8 = scalar_select 0, %s7, %s5
  $region1: #{tpu_custom_call.1} parent=0
    #allocation2 [shape = 'u8[4096]{0}', space=vmem, size = 0x1000, scoped, tag = 'input window, operand 0, single buffered']
    #allocation3 [shape = 's32[1]{0}', space=sflag, size = 0x4, scoped, tag = 'scoped memory for tpu_custom_call.1']
    #allocation4 [shape = 's32[1]{0}', space=sflag, size = 0x4, scoped, tag = 'scoped memory for tpu_custom_call.1']
    #allocation5 [shape = 'u8[524288]{0}', space=vmem, size = 0x80000, scoped, tag = 'input window, operand 1, single buffered']
    #allocation6 [shape = 's32[1]{0}', space=sflag, size = 0x4, scoped, tag = 'scoped memory for tpu_custom_call.1']
    #allocation7 [shape = 'u8[65536]{0}', space=vmem, size = 0x10000, scoped, tag = 'input window, operand 3, single buffered']
    #allocation8 [shape = 'u8[512]{0}', space=vmem, size = 0x400, scoped, tag = 'output window, operand 0, single buffered']
    %9 = vsyncpa [#allocation3], 0
    %10 = vsyncpa [#allocation6], 0
    %11 = vsyncpa [#allocation4], 0
    // Predicated region
    $region2: #{tpu_custom_call.1} parent=1 // pred_check
      _
    $region3: #{tpu_custom_call.1} parent=1 // pred_check_branch
      %13 = sbr.rel (0) target = $region5
    $region4: #{tpu_custom_call.1} parent=1 // pred_region
      %s15 = ssub.s32 128, 128
      %16 = vsyncadd [#allocation3], %s15
      %s18 = sshll.u32 [#allocation2], 4
      %s19 = int_to_ptr.vmem [resolvable:$true] %s18
      %21 = dma.hbm_to_vmem [thread:$0]  %s0, 128, %s19, [#allocation3]
    $region5: #{tpu_custom_call.1} parent=1 // pred_fallthru
      _
    // Predicated region
    $region6: #{tpu_custom_call.1} parent=1 // pred_check
      _
    $region7: #{tpu_custom_call.1} parent=1 // pred_check_branch
      %23 = sbr.rel (0) target = $region9
    $region8: #{tpu_custom_call.1} parent=1 // pred_region
      %s25 = ssub.s32 16384, 16384
      %26 = vsyncadd [#allocation6], %s25
      %s27 = sshll.u32 [#allocation5], 4
      %s28 = int_to_ptr.vmem [resolvable:$true] %s27
      %33 = dma.hbm_to_vmem [thread:$0]  %s1, 16384, %s28, [#allocation6], 128, 128, 8
    $region9: #{tpu_custom_call.1} parent=1 // pred_fallthru
      _
    // Predicated region
    $region10: #{tpu_custom_call.1} parent=1 // pred_check
      _
    $region11: #{tpu_custom_call.1} parent=1 // pred_check_branch
      %35 = sbr.rel (0) target = $region13
    $region12: #{tpu_custom_call.1} parent=1 // pred_region
      _
    $region13: #{tpu_custom_call.1} parent=1 // pred_fallthru
      _
    // Predicated region
    $region14: #{tpu_custom_call.1} parent=1 // pred_check
      _
    $region15: #{tpu_custom_call.1} parent=1 // pred_check_branch
      %37 = sbr.rel (0) target = $region17
    $region16: #{tpu_custom_call.1} parent=1 // pred_region
      %s39 = ssub.s32 2048, 2048
      %40 = vsyncadd [#allocation6], %s39
      %s41 = sshll.u32 [#allocation7], 4
      %s42 = int_to_ptr.vmem [resolvable:$true] %s41
      %47 = dma.hbm_to_vmem [thread:$0]  %s3, 2048, %s42, [#allocation6], 128, 128, 8
    $region17: #{tpu_custom_call.1} parent=1 // pred_fallthru
      _
    // Predicated region
    $region18: #{tpu_custom_call.1} parent=1 // pred_check
      _
    $region19: #{tpu_custom_call.1} parent=1 // pred_check_branch
      %49 = sbr.rel (0) target = $region21
    $region20: #{tpu_custom_call.1} parent=1 // pred_region
      %50 = dma.done [#allocation3], 128
    $region21: #{tpu_custom_call.1} parent=1 // pred_fallthru
      _
    // Predicated region
    $region22: #{tpu_custom_call.1} parent=1 // pred_check
      _
    $region23: #{tpu_custom_call.1} parent=1 // pred_check_branch
      %52 = sbr.rel (0) target = $region25
    $region24: #{tpu_custom_call.1} parent=1 // pred_region
      %53 = dma.done [#allocation6], 16384
    $region25: #{tpu_custom_call.1} parent=1 // pred_fallthru
      _
    // Predicated region
    $region26: #{tpu_custom_call.1} parent=1 // pred_check
      _
    $region27: #{tpu_custom_call.1} parent=1 // pred_check_branch
      %55 = sbr.rel (0) target = $region29
    $region28: #{tpu_custom_call.1} parent=1 // pred_region
      %56 = dma.done [#allocation6], 2048
    $region29: #{tpu_custom_call.1} parent=1 // pred_fallthru
      _
    %v57 = vld [vmem:[#allocation2] sm:$0xff]
    %v58 = vld [vmem:[#allocation5] sm:$0xff]
    %v59 = vld [vmem:[#allocation5 + $0x8] sm:$0xff]
    %v60 = vld [vmem:[#allocation5 + $0x10] sm:$0xff]
    %v61 = vld [vmem:[#allocation5 + $0x18] sm:$0xff]
    %v62 = vld [vmem:[#allocation5 + $0x20] sm:$0xff]
    %v63 = vld [vmem:[#allocation5 + $0x28] sm:$0xff]
    %v64 = vld [vmem:[#allocation5 + $0x30] sm:$0xff]
    %v65 = vld [vmem:[#allocation5 + $0x38] sm:$0xff]
    %v66 = vld [vmem:[#allocation5 + $0x40] sm:$0xff]
    %v67 = vld [vmem:[#allocation5 + $0x48] sm:$0xff]
    %v68 = vld [vmem:[#allocation5 + $0x50] sm:$0xff]
    %v69 = vld [vmem:[#allocation5 + $0x58] sm:$0xff]
    %v70 = vld [vmem:[#allocation5 + $0x60] sm:$0xff]
    %v71 = vld [vmem:[#allocation5 + $0x68] sm:$0xff]
    %v72 = vld [vmem:[#allocation5 + $0x70] sm:$0xff]
    %v73 = vld [vmem:[#allocation5 + $0x78] sm:$0xff]
    %v74 = vld [vmem:[#allocation5 + $0x80] sm:$0xff]
    %v75 = vld [vmem:[#allocation5 + $0x88] sm:$0xff]
    %v76 = vld [vmem:[#allocation5 + $0x90] sm:$0xff]
    %v77 = vld [vmem:[#allocation5 + $0x98] sm:$0xff]
    %v78 = vld [vmem:[#allocation5 + $0xa0] sm:$0xff]
    %v79 = vld [vmem:[#allocation5 + $0xa8] sm:$0xff]
    %v80 = vld [vmem:[#allocation5 + $0xb0] sm:$0xff]
    %v81 = vld [vmem:[#allocation5 + $0xb8] sm:$0xff]
    %v82 = vld [vmem:[#allocation5 + $0xc0] sm:$0xff]
    %v83 = vld [vmem:[#allocation5 + $0xc8] sm:$0xff]
    %v84 = vld [vmem:[#allocation5 + $0xd0] sm:$0xff]
    %v85 = vld [vmem:[#allocation5 + $0xd8] sm:$0xff]
    %v86 = vld [vmem:[#allocation5 + $0xe0] sm:$0xff]
    %v87 = vld [vmem:[#allocation5 + $0xe8] sm:$0xff]
    %v88 = vld [vmem:[#allocation5 + $0xf0] sm:$0xff]
    %v89 = vld [vmem:[#allocation5 + $0xf8] sm:$0xff]
    %v90 = vld [vmem:[#allocation5 + $0x100] sm:$0xff]
    %v91 = vld [vmem:[#allocation5 + $0x108] sm:$0xff]
    %v92 = vld [vmem:[#allocation5 + $0x110] sm:$0xff]
    %v93 = vld [vmem:[#allocation5 + $0x118] sm:$0xff]
    %v94 = vld [vmem:[#allocation5 + $0x120] sm:$0xff]
    %v95 = vld [vmem:[#allocation5 + $0x128] sm:$0xff]
    %v96 = vld [vmem:[#allocation5 + $0x130] sm:$0xff]
    %v97 = vld [vmem:[#allocation5 + $0x138] sm:$0xff]
    %v98 = vld [vmem:[#allocation5 + $0x140] sm:$0xff]
    %v99 = vld [vmem:[#allocation5 + $0x148] sm:$0xff]
    %v100 = vld [vmem:[#allocation5 + $0x150] sm:$0xff]
    %v101 = vld [vmem:[#allocation5 + $0x158] sm:$0xff]
    %v102 = vld [vmem:[#allocation5 + $0x160] sm:$0xff]
    %v103 = vld [vmem:[#allocation5 + $0x168] sm:$0xff]
    %v104 = vld [vmem:[#allocation5 + $0x170] sm:$0xff]
    %v105 = vld [vmem:[#allocation5 + $0x178] sm:$0xff]
    %v106 = vld [vmem:[#allocation5 + $0x180] sm:$0xff]
    %v107 = vld [vmem:[#allocation5 + $0x188] sm:$0xff]
    %v108 = vld [vmem:[#allocation5 + $0x190] sm:$0xff]
    %v109 = vld [vmem:[#allocation5 + $0x198] sm:$0xff]
    %v110 = vld [vmem:[#allocation5 + $0x1a0] sm:$0xff]
    %v111 = vld [vmem:[#allocation5 + $0x1a8] sm:$0xff]
    %v112 = vld [vmem:[#allocation5 + $0x1b0] sm:$0xff]
    %v113 = vld [vmem:[#allocation5 + $0x1b8] sm:$0xff]
    %v114 = vld [vmem:[#allocation5 + $0x1c0] sm:$0xff]
    %v115 = vld [vmem:[#allocation5 + $0x1c8] sm:$0xff]
    %v116 = vld [vmem:[#allocation5 + $0x1d0] sm:$0xff]
    %v117 = vld [vmem:[#allocation5 + $0x1d8] sm:$0xff]
    %v118 = vld [vmem:[#allocation5 + $0x1e0] sm:$0xff]
    %v119 = vld [vmem:[#allocation5 + $0x1e8] sm:$0xff]
    %v120 = vld [vmem:[#allocation5 + $0x1f0] sm:$0xff]
    %v121 = vld [vmem:[#allocation5 + $0x1f8] sm:$0xff]
    %v122 = vld [vmem:[#allocation5 + $0x200] sm:$0xff]
    %v123 = vld [vmem:[#allocation5 + $0x208] sm:$0xff]
    %v124 = vld [vmem:[#allocation5 + $0x210] sm:$0xff]
    %v125 = vld [vmem:[#allocation5 + $0x218] sm:$0xff]
    %v126 = vld [vmem:[#allocation5 + $0x220] sm:$0xff]
    %v127 = vld [vmem:[#allocation5 + $0x228] sm:$0xff]
    %v128 = vld [vmem:[#allocation5 + $0x230] sm:$0xff]
    %v129 = vld [vmem:[#allocation5 + $0x238] sm:$0xff]
    %v130 = vld [vmem:[#allocation5 + $0x240] sm:$0xff]
    %v131 = vld [vmem:[#allocation5 + $0x248] sm:$0xff]
    %v132 = vld [vmem:[#allocation5 + $0x250] sm:$0xff]
    %v133 = vld [vmem:[#allocation5 + $0x258] sm:$0xff]
    %v134 = vld [vmem:[#allocation5 + $0x260] sm:$0xff]
    %v135 = vld [vmem:[#allocation5 + $0x268] sm:$0xff]
    %v136 = vld [vmem:[#allocation5 + $0x270] sm:$0xff]
    %v137 = vld [vmem:[#allocation5 + $0x278] sm:$0xff]
    %v138 = vld [vmem:[#allocation5 + $0x280] sm:$0xff]
    %v139 = vld [vmem:[#allocation5 + $0x288] sm:$0xff]
    %v140 = vld [vmem:[#allocation5 + $0x290] sm:$0xff]
    %v141 = vld [vmem:[#allocation5 + $0x298] sm:$0xff]
    %v142 = vld [vmem:[#allocation5 + $0x2a0] sm:$0xff]
    %v143 = vld [vmem:[#allocation5 + $0x2a8] sm:$0xff]
    %v144 = vld [vmem:[#allocation5 + $0x2b0] sm:$0xff]
    %v145 = vld [vmem:[#allocation5 + $0x2b8] sm:$0xff]
    %v146 = vld [vmem:[#allocation5 + $0x2c0] sm:$0xff]
    %v147 = vld [vmem:[#allocation5 + $0x2c8] sm:$0xff]
    %v148 = vld [vmem:[#allocation5 + $0x2d0] sm:$0xff]
    %v149 = vld [vmem:[#allocation5 + $0x2d8] sm:$0xff]
    %v150 = vld [vmem:[#allocation5 + $0x2e0] sm:$0xff]
    %v151 = vld [vmem:[#allocation5 + $0x2e8] sm:$0xff]
    %v152 = vld [vmem:[#allocation5 + $0x2f0] sm:$0xff]
    %v153 = vld [vmem:[#allocation5 + $0x2f8] sm:$0xff]
    %v154 = vld [vmem:[#allocation5 + $0x300] sm:$0xff]
    %v155 = vld [vmem:[#allocation5 + $0x308] sm:$0xff]
    %v156 = vld [vmem:[#allocation5 + $0x310] sm:$0xff]
    %v157 = vld [vmem:[#allocation5 + $0x318] sm:$0xff]
    %v158 = vld [vmem:[#allocation5 + $0x320] sm:$0xff]
    %v159 = vld [vmem:[#allocation5 + $0x328] sm:$0xff]
    %v160 = vld [vmem:[#allocation5 + $0x330] sm:$0xff]
    %v161 = vld [vmem:[#allocation5 + $0x338] sm:$0xff]
    %v162 = vld [vmem:[#allocation5 + $0x340] sm:$0xff]
    %v163 = vld [vmem:[#allocation5 + $0x348] sm:$0xff]
    %v164 = vld [vmem:[#allocation5 + $0x350] sm:$0xff]
    %v165 = vld [vmem:[#allocation5 + $0x358] sm:$0xff]
    %v166 = vld [vmem:[#allocation5 + $0x360] sm:$0xff]
    %v167 = vld [vmem:[#allocation5 + $0x368] sm:$0xff]
    %v168 = vld [vmem:[#allocation5 + $0x370] sm:$0xff]
    %v169 = vld [vmem:[#allocation5 + $0x378] sm:$0xff]
    %v170 = vld [vmem:[#allocation5 + $0x380] sm:$0xff]
    %v171 = vld [vmem:[#allocation5 + $0x388] sm:$0xff]
    %v172 = vld [vmem:[#allocation5 + $0x390] sm:$0xff]
    %v173 = vld [vmem:[#allocation5 + $0x398] sm:$0xff]
    %v174 = vld [vmem:[#allocation5 + $0x3a0] sm:$0xff]
    %v175 = vld [vmem:[#allocation5 + $0x3a8] sm:$0xff]
    %v176 = vld [vmem:[#allocation5 + $0x3b0] sm:$0xff]
    %v177 = vld [vmem:[#allocation5 + $0x3b8] sm:$0xff]
    %v178 = vld [vmem:[#allocation5 + $0x3c0] sm:$0xff]
    %v179 = vld [vmem:[#allocation5 + $0x3c8] sm:$0xff]
    %v180 = vld [vmem:[#allocation5 + $0x3d0] sm:$0xff]
    %v181 = vld [vmem:[#allocation5 + $0x3d8] sm:$0xff]
    %v182 = vld [vmem:[#allocation5 + $0x3e0] sm:$0xff]
    %v183 = vld [vmem:[#allocation5 + $0x3e8] sm:$0xff]
    %v184 = vld [vmem:[#allocation5 + $0x3f0] sm:$0xff]
    %v185 = vld [vmem:[#allocation5 + $0x3f8] sm:$0xff]
    %v186 = vld [vmem:[%s2] sm:$0x1]
    %v188 = vlaneseq
    %v189 = vshrl.u32 %v188, 7
    %v190 = vsub.s32 0, %v189
    %v191 = vrot.slane %v57, %v190
    %v192 = vlaneseq
    %v193 = vshrl.u32 %v192, 7
    %v194 = vsub.s32 1, %v193
    %v195 = vrot.slane %v57, %v194
    %v196 = vlaneseq
    %v197 = vshrl.u32 %v196, 7
    %v198 = vsub.s32 2, %v197
    %v199 = vrot.slane %v57, %v198
    %v200 = vlaneseq
    %v201 = vshrl.u32 %v200, 7
    %v202 = vsub.s32 3, %v201
    %v203 = vrot.slane %v57, %v202
    %v204 = vlaneseq
    %v205 = vshrl.u32 %v204, 7
    %v206 = vsub.s32 4, %v205
    %v207 = vrot.slane %v57, %v206
    %v208 = vlaneseq
    %v209 = vshrl.u32 %v208, 7
    %v210 = vsub.s32 5, %v209
    %v211 = vrot.slane %v57, %v210
    %v212 = vlaneseq
    %v213 = vshrl.u32 %v212, 7
    %v214 = vsub.s32 6, %v213
    %v215 = vrot.slane %v57, %v214
    %v216 = vlaneseq
    %v217 = vshrl.u32 %v216, 7
    %v218 = vsub.s32 7, %v217
    %v219 = vrot.slane %v57, %v218
    %228 = vmatprep.subr.mxu0 0.0
    %229 = vmatpush1.msra.mxu0 %v58
    %230 = vmatprep.subr.mxu0 0.0
    %231 = vmatpush1.msra.mxu0 %v59
    %232 = vmatprep.subr.mxu0 0.0
    %233 = vmatpush1.msra.mxu0 %v60
    %234 = vmatprep.subr.mxu0 0.0
    %235 = vmatpush1.msra.mxu0 %v61
    %236 = vmatprep.subr.mxu0 0.0
    %237 = vmatpush1.msra.mxu0 %v62
    %238 = vmatprep.subr.mxu0 0.0
    %239 = vmatpush1.msra.mxu0 %v63
    %240 = vmatprep.subr.mxu0 0.0
    %241 = vmatpush1.msra.mxu0 %v64
    %242 = vmatprep.subr.mxu0 0.0
    %243 = vmatpush1.msra.mxu0 %v65
    %244 = vmatprep.subr.mxu0 0.0
    %245 = vmatpush1.msra.mxu0 %v66
    %246 = vmatprep.subr.mxu0 0.0
    %247 = vmatpush1.msra.mxu0 %v67
    %248 = vmatprep.subr.mxu0 0.0
    %249 = vmatpush1.msra.mxu0 %v68
    %250 = vmatprep.subr.mxu0 0.0
    %251 = vmatpush1.msra.mxu0 %v69
    %252 = vmatprep.subr.mxu0 0.0
    %253 = vmatpush1.msra.mxu0 %v70
    %254 = vmatprep.subr.mxu0 0.0
    %255 = vmatpush1.msra.mxu0 %v71
    %256 = vmatprep.subr.mxu0 0.0
    %257 = vmatpush1.msra.mxu0 %v72
    %258 = vmatprep.subr.mxu0 0.0
    %259 = vmatpush1.msra.mxu0 %v73
    %260 = vmatprep.subr.mxu0 0.0
    %261 = vmatpush1.msra.mxu0 %v74
    %262 = vmatprep.subr.mxu0 0.0
    %263 = vmatpush1.msra.mxu0 %v75
    %264 = vmatprep.subr.mxu0 0.0
    %265 = vmatpush1.msra.mxu0 %v76
    %266 = vmatprep.subr.mxu0 0.0
    %267 = vmatpush1.msra.mxu0 %v77
    %268 = vmatprep.subr.mxu0 0.0
    %269 = vmatpush1.msra.mxu0 %v78
    %270 = vmatprep.subr.mxu0 0.0
    %271 = vmatpush1.msra.mxu0 %v79
    %272 = vmatprep.subr.mxu0 0.0
    %273 = vmatpush1.msra.mxu0 %v80
    %274 = vmatprep.subr.mxu0 0.0
    %275 = vmatpush1.msra.mxu0 %v81
    %276 = vmatprep.subr.mxu0 0.0
    %277 = vmatpush1.msra.mxu0 %v82
    %278 = vmatprep.subr.mxu0 0.0
    %279 = vmatpush1.msra.mxu0 %v83
    %280 = vmatprep.subr.mxu0 0.0
    %281 = vmatpush1.msra.mxu0 %v84
    %282 = vmatprep.subr.mxu0 0.0
    %283 = vmatpush1.msra.mxu0 %v85
    %284 = vmatprep.subr.mxu0 0.0
    %285 = vmatpush1.msra.mxu0 %v86
    %286 = vmatprep.subr.mxu0 0.0
    %287 = vmatpush1.msra.mxu0 %v87
    %288 = vmatprep.subr.mxu0 0.0
    %289 = vmatpush1.msra.mxu0 %v88
    %290 = vmatprep.subr.mxu0 0.0
    %291 = vmatpush1.msra.mxu0 %v89
    %292 = vmatprep.mubr.f32.mxu0 %v195
    %293 = vmatmul.mubr.f32.gmra.mrb[0].mxu0 %v191
    %v294 = vpop.f32.mrb[0].mxu0
    %v295 = vadd.f32 %v186, %v294
    %v296 = vpop.f32.mrb[0].mxu0
    %297 = vdwg.mxu0
    %298 = vmatprep.subr.mxu0 0.0
    %299 = vmatpush1.msra.mxu0 %v90
    %300 = vmatprep.subr.mxu0 0.0
    %301 = vmatpush1.msra.mxu0 %v91
    %302 = vmatprep.subr.mxu0 0.0
    %303 = vmatpush1.msra.mxu0 %v92
    %304 = vmatprep.subr.mxu0 0.0
    %305 = vmatpush1.msra.mxu0 %v93
    %306 = vmatprep.subr.mxu0 0.0
    %307 = vmatpush1.msra.mxu0 %v94
    %308 = vmatprep.subr.mxu0 0.0
    %309 = vmatpush1.msra.mxu0 %v95
    %310 = vmatprep.subr.mxu0 0.0
    %311 = vmatpush1.msra.mxu0 %v96
    %312 = vmatprep.subr.mxu0 0.0
    %313 = vmatpush1.msra.mxu0 %v97
    %314 = vmatprep.subr.mxu0 0.0
    %315 = vmatpush1.msra.mxu0 %v98
    %316 = vmatprep.subr.mxu0 0.0
    %317 = vmatpush1.msra.mxu0 %v99
    %318 = vmatprep.subr.mxu0 0.0
    %319 = vmatpush1.msra.mxu0 %v100
    %320 = vmatprep.subr.mxu0 0.0
    %321 = vmatpush1.msra.mxu0 %v101
    %322 = vmatprep.subr.mxu0 0.0
    %323 = vmatpush1.msra.mxu0 %v102
    %324 = vmatprep.subr.mxu0 0.0
    %325 = vmatpush1.msra.mxu0 %v103
    %326 = vmatprep.subr.mxu0 0.0
    %327 = vmatpush1.msra.mxu0 %v104
    %328 = vmatprep.subr.mxu0 0.0
    %329 = vmatpush1.msra.mxu0 %v105
    %330 = vmatprep.subr.mxu0 0.0
    %331 = vmatpush1.msra.mxu0 %v106
    %332 = vmatprep.subr.mxu0 0.0
    %333 = vmatpush1.msra.mxu0 %v107
    %334 = vmatprep.subr.mxu0 0.0
    %335 = vmatpush1.msra.mxu0 %v108
    %336 = vmatprep.subr.mxu0 0.0
    %337 = vmatpush1.msra.mxu0 %v109
    %338 = vmatprep.subr.mxu0 0.0
    %339 = vmatpush1.msra.mxu0 %v110
    %340 = vmatprep.subr.mxu0 0.0
    %341 = vmatpush1.msra.mxu0 %v111
    %342 = vmatprep.subr.mxu0 0.0
    %343 = vmatpush1.msra.mxu0 %v112
    %344 = vmatprep.subr.mxu0 0.0
    %345 = vmatpush1.msra.mxu0 %v113
    %346 = vmatprep.subr.mxu0 0.0
    %347 = vmatpush1.msra.mxu0 %v114
    %348 = vmatprep.subr.mxu0 0.0
    %349 = vmatpush1.msra.mxu0 %v115
    %350 = vmatprep.subr.mxu0 0.0
    %351 = vmatpush1.msra.mxu0 %v116
    %352 = vmatprep.subr.mxu0 0.0
    %353 = vmatpush1.msra.mxu0 %v117
    %354 = vmatprep.subr.mxu0 0.0
    %355 = vmatpush1.msra.mxu0 %v118
    %356 = vmatprep.subr.mxu0 0.0
    %357 = vmatpush1.msra.mxu0 %v119
    %358 = vmatprep.subr.mxu0 0.0
    %359 = vmatpush1.msra.mxu0 %v120
    %360 = vmatprep.subr.mxu0 0.0
    %361 = vmatpush1.msra.mxu0 %v121
    %362 = vmatprep.mubr.f32.mxu0 %v203
    %363 = vmatmul.mubr.f32.gmra.mrb[0].mxu0 %v199
    %v364 = vpop.f32.mrb[0].mxu0
    %v365 = vadd.f32 %v295, %v364
    %v366 = vpop.f32.mrb[0].mxu0
    %367 = vdwg.mxu0
    %368 = vmatprep.subr.mxu0 0.0
    %369 = vmatpush1.msra.mxu0 %v122
    %370 = vmatprep.subr.mxu0 0.0
    %371 = vmatpush1.msra.mxu0 %v123
    %372 = vmatprep.subr.mxu0 0.0
    %373 = vmatpush1.msra.mxu0 %v124
    %374 = vmatprep.subr.mxu0 0.0
    %375 = vmatpush1.msra.mxu0 %v125
    %376 = vmatprep.subr.mxu0 0.0
    %377 = vmatpush1.msra.mxu0 %v126
    %378 = vmatprep.subr.mxu0 0.0
    %379 = vmatpush1.msra.mxu0 %v127
    %380 = vmatprep.subr.mxu0 0.0
    %381 = vmatpush1.msra.mxu0 %v128
    %382 = vmatprep.subr.mxu0 0.0
    %383 = vmatpush1.msra.mxu0 %v129
    %384 = vmatprep.subr.mxu0 0.0
    %385 = vmatpush1.msra.mxu0 %v130
    %386 = vmatprep.subr.mxu0 0.0
    %387 = vmatpush1.msra.mxu0 %v131
    %388 = vmatprep.subr.mxu0 0.0
    %389 = vmatpush1.msra.mxu0 %v132
    %390 = vmatprep.subr.mxu0 0.0
    %391 = vmatpush1.msra.mxu0 %v133
    %392 = vmatprep.subr.mxu0 0.0
    %393 = vmatpush1.msra.mxu0 %v134
    %394 = vmatprep.subr.mxu0 0.0
    %395 = vmatpush1.msra.mxu0 %v135
    %396 = vmatprep.subr.mxu0 0.0
    %397 = vmatpush1.msra.mxu0 %v136
    %398 = vmatprep.subr.mxu0 0.0
    %399 = vmatpush1.msra.mxu0 %v137
    %400 = vmatprep.subr.mxu0 0.0
    %401 = vmatpush1.msra.mxu0 %v138
    %402 = vmatprep.subr.mxu0 0.0
    %403 = vmatpush1.msra.mxu0 %v139
    %404 = vmatprep.subr.mxu0 0.0
    %405 = vmatpush1.msra.mxu0 %v140
    %406 = vmatprep.subr.mxu0 0.0
    %407 = vmatpush1.msra.mxu0 %v141
    %408 = vmatprep.subr.mxu0 0.0
    %409 = vmatpush1.msra.mxu0 %v142
    %410 = vmatprep.subr.mxu0 0.0
    %411 = vmatpush1.msra.mxu0 %v143
    %412 = vmatprep.subr.mxu0 0.0
    %413 = vmatpush1.msra.mxu0 %v144
    %414 = vmatprep.subr.mxu0 0.0
    %415 = vmatpush1.msra.mxu0 %v145
    %416 = vmatprep.subr.mxu0 0.0
    %417 = vmatpush1.msra.mxu0 %v146
    %418 = vmatprep.subr.mxu0 0.0
    %419 = vmatpush1.msra.mxu0 %v147
    %420 = vmatprep.subr.mxu0 0.0
    %421 = vmatpush1.msra.mxu0 %v148
    %422 = vmatprep.subr.mxu0 0.0
    %423 = vmatpush1.msra.mxu0 %v149
    %424 = vmatprep.subr.mxu0 0.0
    %425 = vmatpush1.msra.mxu0 %v150
    %426 = vmatprep.subr.mxu0 0.0
    %427 = vmatpush1.msra.mxu0 %v151
    %428 = vmatprep.subr.mxu0 0.0
    %429 = vmatpush1.msra.mxu0 %v152
    %430 = vmatprep.subr.mxu0 0.0
    %431 = vmatpush1.msra.mxu0 %v153
    %432 = vmatprep.mubr.f32.mxu0 %v211
    %433 = vmatmul.mubr.f32.gmra.mrb[0].mxu0 %v207
    %v434 = vpop.f32.mrb[0].mxu0
    %v435 = vadd.f32 %v365, %v434
    %v436 = vpop.f32.mrb[0].mxu0
    %437 = vdwg.mxu0
    %438 = vmatprep.subr.mxu0 0.0
    %439 = vmatpush1.msra.mxu0 %v154
    %440 = vmatprep.subr.mxu0 0.0
    %441 = vmatpush1.msra.mxu0 %v155
    %442 = vmatprep.subr.mxu0 0.0
    %443 = vmatpush1.msra.mxu0 %v156
    %444 = vmatprep.subr.mxu0 0.0
    %445 = vmatpush1.msra.mxu0 %v157
    %446 = vmatprep.subr.mxu0 0.0
    %447 = vmatpush1.msra.mxu0 %v158
    %448 = vmatprep.subr.mxu0 0.0
    %449 = vmatpush1.msra.mxu0 %v159
    %450 = vmatprep.subr.mxu0 0.0
    %451 = vmatpush1.msra.mxu0 %v160
    %452 = vmatprep.subr.mxu0 0.0
    %453 = vmatpush1.msra.mxu0 %v161
    %454 = vmatprep.subr.mxu0 0.0
    %455 = vmatpush1.msra.mxu0 %v162
    %456 = vmatprep.subr.mxu0 0.0
    %457 = vmatpush1.msra.mxu0 %v163
    %458 = vmatprep.subr.mxu0 0.0
    %459 = vmatpush1.msra.mxu0 %v164
    %460 = vmatprep.subr.mxu0 0.0
    %461 = vmatpush1.msra.mxu0 %v165
    %462 = vmatprep.subr.mxu0 0.0
    %463 = vmatpush1.msra.mxu0 %v166
    %464 = vmatprep.subr.mxu0 0.0
    %465 = vmatpush1.msra.mxu0 %v167
    %466 = vmatprep.subr.mxu0 0.0
    %467 = vmatpush1.msra.mxu0 %v168
    %468 = vmatprep.subr.mxu0 0.0
    %469 = vmatpush1.msra.mxu0 %v169
    %470 = vmatprep.subr.mxu0 0.0
    %471 = vmatpush1.msra.mxu0 %v170
    %472 = vmatprep.subr.mxu0 0.0
    %473 = vmatpush1.msra.mxu0 %v171
    %474 = vmatprep.subr.mxu0 0.0
    %475 = vmatpush1.msra.mxu0 %v172
    %476 = vmatprep.subr.mxu0 0.0
    %477 = vmatpush1.msra.mxu0 %v173
    %478 = vmatprep.subr.mxu0 0.0
    %479 = vmatpush1.msra.mxu0 %v174
    %480 = vmatprep.subr.mxu0 0.0
    %481 = vmatpush1.msra.mxu0 %v175
    %482 = vmatprep.subr.mxu0 0.0
    %483 = vmatpush1.msra.mxu0 %v176
    %484 = vmatprep.subr.mxu0 0.0
    %485 = vmatpush1.msra.mxu0 %v177
    %486 = vmatprep.subr.mxu0 0.0
    %487 = vmatpush1.msra.mxu0 %v178
    %488 = vmatprep.subr.mxu0 0.0
    %489 = vmatpush1.msra.mxu0 %v179
    %490 = vmatprep.subr.mxu0 0.0
    %491 = vmatpush1.msra.mxu0 %v180
    %492 = vmatprep.subr.mxu0 0.0
    %493 = vmatpush1.msra.mxu0 %v181
    %494 = vmatprep.subr.mxu0 0.0
    %495 = vmatpush1.msra.mxu0 %v182
    %496 = vmatprep.subr.mxu0 0.0
    %497 = vmatpush1.msra.mxu0 %v183
    %498 = vmatprep.subr.mxu0 0.0
    %499 = vmatpush1.msra.mxu0 %v184
    %500 = vmatprep.subr.mxu0 0.0
    %501 = vmatpush1.msra.mxu0 %v185
    %502 = vmatprep.mubr.f32.mxu0 %v219
    %503 = vmatmul.mubr.f32.gmra.mrb[0].mxu0 %v215
    %v504 = vpop.f32.mrb[0].mxu0
    %v505 = vadd.f32 %v435, %v504
    %v506 = vpop.f32.mrb[0].mxu0
    %507 = vdwg.mxu0
    %v508 = vmul.f32 %v505, %v505
    %v509 = vld [vmem:[#allocation7] sm:$0xff]
    %v510 = vld [vmem:[#allocation7 + $0x8] sm:$0xff]
    %v511 = vld [vmem:[#allocation7 + $0x10] sm:$0xff]
    %v512 = vld [vmem:[#allocation7 + $0x18] sm:$0xff]
    %v513 = vld [vmem:[#allocation7 + $0x20] sm:$0xff]
    %v514 = vld [vmem:[#allocation7 + $0x28] sm:$0xff]
    %v515 = vld [vmem:[#allocation7 + $0x30] sm:$0xff]
    %v516 = vld [vmem:[#allocation7 + $0x38] sm:$0xff]
    %v517 = vld [vmem:[#allocation7 + $0x40] sm:$0xff]
    %v518 = vld [vmem:[#allocation7 + $0x48] sm:$0xff]
    %v519 = vld [vmem:[#allocation7 + $0x50] sm:$0xff]
    %v520 = vld [vmem:[#allocation7 + $0x58] sm:$0xff]
    %v521 = vld [vmem:[#allocation7 + $0x60] sm:$0xff]
    %v522 = vld [vmem:[#allocation7 + $0x68] sm:$0xff]
    %v523 = vld [vmem:[#allocation7 + $0x70] sm:$0xff]
    %v524 = vld [vmem:[#allocation7 + $0x78] sm:$0xff]
    %525 = vmatprep.subr.mxu0 0.0
    %526 = vmatpush1.msra.mxu0 %v509
    %527 = vmatprep.subr.mxu0 0.0
    %528 = vmatpush1.msra.mxu0 %v510
    %529 = vmatprep.subr.mxu0 0.0
    %530 = vmatpush1.msra.mxu0 %v511
    %531 = vmatprep.subr.mxu0 0.0
    %532 = vmatpush1.msra.mxu0 %v512
    %533 = vmatprep.subr.mxu0 0.0
    %534 = vmatpush1.msra.mxu0 %v513
    %535 = vmatprep.subr.mxu0 0.0
    %536 = vmatpush1.msra.mxu0 %v514
    %537 = vmatprep.subr.mxu0 0.0
    %538 = vmatpush1.msra.mxu0 %v515
    %539 = vmatprep.subr.mxu0 0.0
    %540 = vmatpush1.msra.mxu0 %v516
    %541 = vmatprep.subr.mxu0 0.0
    %542 = vmatpush1.msra.mxu0 %v517
    %543 = vmatprep.subr.mxu0 0.0
    %544 = vmatpush1.msra.mxu0 %v518
    %545 = vmatprep.subr.mxu0 0.0
    %546 = vmatpush1.msra.mxu0 %v519
    %547 = vmatprep.subr.mxu0 0.0
    %548 = vmatpush1.msra.mxu0 %v520
    %549 = vmatprep.subr.mxu0 0.0
    %550 = vmatpush1.msra.mxu0 %v521
    %551 = vmatprep.subr.mxu0 0.0
    %552 = vmatpush1.msra.mxu0 %v522
    %553 = vmatprep.subr.mxu0 0.0
    %554 = vmatpush1.msra.mxu0 %v523
    %555 = vmatprep.subr.mxu0 0.0
    %556 = vmatpush1.msra.mxu0 %v524
    %557 = vmatprep.subr.mxu0 0.0
    %558 = vmatpush1.msra.mxu0 0.0
    %559 = vmatprep.subr.mxu0 0.0
    %560 = vmatpush1.msra.mxu0 0.0
    %561 = vmatprep.subr.mxu0 0.0
    %562 = vmatpush1.msra.mxu0 0.0
    %563 = vmatprep.subr.mxu0 0.0
    %564 = vmatpush1.msra.mxu0 0.0
    %565 = vmatprep.subr.mxu0 0.0
    %566 = vmatpush1.msra.mxu0 0.0
    %567 = vmatprep.subr.mxu0 0.0
    %568 = vmatpush1.msra.mxu0 0.0
    %569 = vmatprep.subr.mxu0 0.0
    %570 = vmatpush1.msra.mxu0 0.0
    %571 = vmatprep.subr.mxu0 0.0
    %572 = vmatpush1.msra.mxu0 0.0
    %573 = vmatprep.subr.mxu0 0.0
    %574 = vmatpush1.msra.mxu0 0.0
    %575 = vmatprep.subr.mxu0 0.0
    %576 = vmatpush1.msra.mxu0 0.0
    %577 = vmatprep.subr.mxu0 0.0
    %578 = vmatpush1.msra.mxu0 0.0
    %579 = vmatprep.subr.mxu0 0.0
    %580 = vmatpush1.msra.mxu0 0.0
    %581 = vmatprep.subr.mxu0 0.0
    %582 = vmatpush1.msra.mxu0 0.0
    %583 = vmatprep.subr.mxu0 0.0
    %584 = vmatpush1.msra.mxu0 0.0
    %585 = vmatprep.subr.mxu0 0.0
    %586 = vmatpush1.msra.mxu0 0.0
    %587 = vmatprep.subr.mxu0 0.0
    %588 = vmatpush1.msra.mxu0 0.0
    %589 = vmatprep.mubr.f32.mxu0 0.0
    %590 = vmatmul.mubr.f32.gmra.mrb[0].mxu0 %v508
    %v591 = vpop.f32.mrb[0].mxu0
    %v592 = vadd.f32 0.0, %v591
    %v593 = vpop.f32.mrb[0].mxu0
    %594 = vdwg.mxu0
    %v595 = vrsqrt.pop %v592
    %v596 = vmul.f32 %v505, %v595
    %597 = vst [vmem:[#allocation8] sm:$0x1] %v596
    // Predicated region
    $region30: #{tpu_custom_call.1} parent=1 // pred_check
      _
    $region31: #{tpu_custom_call.1} parent=1 // pred_check_branch
      %599 = sbr.rel (0) target = $region33
    $region32: #{tpu_custom_call.1} parent=1 // pred_region
      %s601 = ssub.s32 16, 16
      %602 = vsyncadd [#allocation4], %s601
      %s604 = sshll.u32 [#allocation8], 4
      %s605 = int_to_ptr.vmem [resolvable:$true] %s604
      %607 = dma.vmem_to_hbm [thread:$0]  %s605, 16, %s4, [#allocation4]
    $region33: #{tpu_custom_call.1} parent=1 // pred_fallthru
      _
    // Predicated region
    $region34: #{tpu_custom_call.1} parent=1 // pred_check
      _
    $region35: #{tpu_custom_call.1} parent=1 // pred_check_branch
      %609 = sbr.rel (0) target = $region37
    $region36: #{tpu_custom_call.1} parent=1 // pred_region
      %610 = dma.done [#allocation4], 16
    $region37: #{tpu_custom_call.1} parent=1 // pred_fallthru
      _
    %611 = vsyncpa [#allocation3], 1
    %612 = vsyncpa [#allocation6], 1
    %613 = vsyncpa [#allocation4], 1

</llo_original>
